<compile_context>
chip_gen: v5e
topology: v5e:2x2
jax: 0.10.0
libtpu: 0.0.40
codegen_flags: <defaults>
</compile_context>

<pallas_src>
import math

import jax
import jax.numpy as jnp
from jax import lax
from jax.experimental import pallas as pl
from jax.experimental.pallas import tpu as pltpu


def embedding_kernel(t_ref, inv_exps_ref, phase_ref, w_ref, b_ref, o_ref):
    """linear(sin_embedding(t)) for one batch tile.

    t_ref:        (tb, 1)   f32 timesteps
    inv_exps_ref: (1, Dp)   f32 precomputed 10000**(-2*(j//2)/D); zero in pad cols
    phase_ref:    (1, Dp)   f32 precomputed (j % 2) * pi/2; zero in pad cols
    w_ref:        (Dp, Dp)  bf16 pre-transposed Linear weight (in, out), zero-padded
    b_ref:        (1, Dp)   f32 bias, zero-padded
    o_ref:        (tb, Dp)  f32 output
    """
    # fracs = t * 10000**(-2k/D): one VPU multiply against the hoisted table.
    fracs = t_ref[...] * inv_exps_ref[...]               # (tb,1)*(1,Dp) -> (tb,Dp)
    # Interleaved sin/cos in a single EUP pass: cos(x) = sin(x + pi/2).
    # Padded columns evaluate sin(0) = 0 and hit zero weight rows -> no effect.
    emb = jnp.sin(fracs + phase_ref[...])                # (tb, Dp) f32
    # MXU-native (M,K)x(K,N) contraction, bf16 operands, f32 accumulation.
    o_ref[...] = (
        lax.dot_general(
            emb.astype(jnp.bfloat16), w_ref[...],
            dimension_numbers=(((1,), (0,)), ((), ())),
            preferred_element_type=jnp.float32,
        )
        + b_ref[...]
    )


def _pick_batch_tile(B, batch_tile):
    """Large tiles to fill the MXU M dim; >=2 grid steps for big B (v7x megacore)."""
    tb = min(B, batch_tile)
    if B >= 512:                        # only split once the matmul dominates
        tb = min(tb, pl.cdiv(B, 2))     # >=2 grid steps -> shards across 2 TCs
    if tb < B:
        tb = max(8, (tb // 8) * 8)      # sublane-aligned tiles when actually tiling
    return tb


def embedding_forward(t, weight, bias, *, batch_tile=512):
    """t: (B,) numeric; weight: (D, D) PyTorch (out, in); bias: (D,)."""
    B = t.shape[0]
    D = weight.shape[0]
    assert D % 2 == 0, "sinusoidal embedding assumes even emb_dim"

    # Pad the feature dim to a lane-dense multiple of 128 (unmasked vst stores,
    # MXU-aligned K/N); padded columns are exactly zero and are sliced off below.
    Dp = max(128, pl.cdiv(D, 128) * 128)

    t2 = t.astype(jnp.float32).reshape(B, 1)

    # One-time wrapper-side weight prep (folded/amortized by XLA under jit):
    # transpose to (in, out) for MXU-native contraction, cast to bf16, zero-pad.
    w_t = jnp.pad(weight.astype(jnp.bfloat16).T, ((0, Dp - D), (0, Dp - D)))
    b2 = jnp.pad(bias.astype(jnp.float32), (0, Dp - D)).reshape(1, Dp)

    # Constant tables (depend only on D): 10000**(-2*(j//2)/D) and (j%2)*pi/2.
    col = jnp.arange(D, dtype=jnp.int32)
    k = (col // 2).astype(jnp.float32)
    inv_exps = jnp.power(jnp.float32(10000.0), -2.0 * k / jnp.float32(D))
    inv_exps = jnp.pad(inv_exps, (0, Dp - D)).reshape(1, Dp)
    phase = (col % 2).astype(jnp.float32) * jnp.float32(math.pi / 2.0)
    phase = jnp.pad(phase, (0, Dp - D)).reshape(1, Dp)

    tb = _pick_batch_tile(B, batch_tile)
    grid = (pl.cdiv(B, tb),)

    # VMEM budget: single-buffered bf16 weight + double-buffered f32 output/emb
    # tiles + tables, with headroom; capped at 64 MiB (v7x physical VMEM).
    vmem_bytes = (
        Dp * Dp * 2                # bf16 weight, single-buffered (grid-invariant)
        + 2 * tb * Dp * 4          # f32 output tile, double-buffered
        + 2 * tb * Dp * 4          # in-kernel f32 sinusoid / dot staging
        + 2 * (tb + 3 * Dp) * 4    # timestep tile + tables + bias, double-buffered
        + (2 << 20)                # headroom
    )
    vmem_limit = int(min(64 * 1024 * 1024, max(32 * 1024 * 1024, vmem_bytes)))

    cost = pl.CostEstimate(
        flops=2 * B * Dp * Dp,
        transcendentals=B * Dp,
        bytes_accessed=B * 4 + Dp * Dp * 2 + 3 * Dp * 4 + B * Dp * 4,
    )

    out = pl.pallas_call(
        embedding_kernel,
        out_shape=jax.ShapeDtypeStruct((B, Dp), jnp.float32),
        grid=grid,
        in_specs=[
            pl.BlockSpec((tb, 1), lambda i: (i, 0)),     # timesteps, tiled over batch
            pl.BlockSpec((1, Dp), lambda i: (0, 0)),     # inv_exps table (broadcast)
            pl.BlockSpec((1, Dp), lambda i: (0, 0)),     # phase table (broadcast)
            pl.BlockSpec((Dp, Dp), lambda i: (0, 0),     # weight: grid-invariant,
                         pipeline_mode=pl.Buffered(1)),  #   single-buffered
            pl.BlockSpec((1, Dp), lambda i: (0, 0)),     # bias
        ],
        out_specs=pl.BlockSpec((tb, Dp), lambda i: (i, 0)),
        compiler_params=pltpu.CompilerParams(
            dimension_semantics=("parallel",),           # batch rows are independent
            vmem_limit_bytes=vmem_limit,
        ),
        cost_estimate=cost,
    )(t2, inv_exps, phase, w_t, b2)

    return out[:, :D]


def _reference(t, weight, bias):
    """Pure-JAX reference mirroring the PyTorch module exactly (f32 end-to-end)."""
    B = t.shape[0]
    D = weight.shape[0]
    t2 = t.astype(jnp.float32).reshape(B, 1)
    half = D // 2
    indices = jnp.arange(half, dtype=jnp.float32)
    exps = jnp.power(jnp.float32(10000.0), 2.0 * indices / D).reshape(1, half)
    fracs = t2 / exps
    emb = jnp.stack((jnp.sin(fracs), jnp.cos(fracs)), axis=-1).reshape(B, D)
    return emb @ weight.T + bias


if __name__ == "__main__":
    B, D = 8, 32  # emb_dim = 32

    key = jax.random.PRNGKey(0)
    k_t, k_w, k_b = jax.random.split(key, 3)

    # Diffusion-style integer timesteps.
    t = jax.random.randint(k_t, (B,), 0, 1000).astype(jnp.float32)

    # PyTorch-style Linear init: uniform(-1/sqrt(D), 1/sqrt(D)).
    bound = 1.0 / jnp.sqrt(jnp.float32(D))
    weight = jax.random.uniform(k_w, (D, D), jnp.float32, -bound, bound)
    bias = jax.random.uniform(k_b, (D,), jnp.float32, -bound, bound)

    fwd = jax.jit(embedding_forward)
    out = jax.block_until_ready(fwd(t, weight, bias))

    ref = _reference(t, weight, bias)
    assert out.shape == (B, D)
    # bf16 dot operands (with f32 accumulation) + the cos(x)=sin(x+pi/2) fold:
    # ~1e-2-level relative tolerance is standard for timestep embeddings.
    assert jnp.allclose(out, ref, atol=3e-2, rtol=3e-2), "mismatch vs reference"

    print("KERNEL_OK")
</pallas_src>

<mosaic_0001>
module attributes {stable_mosaic.version = 11 : i64} {
  func.func @embedding_kernel(%arg0: i32, %arg1: memref<8x1xf32, #tpu.memory_space<vmem>>, %arg2: memref<1x128xf32, #tpu.memory_space<vmem>>, %arg3: memref<1x128xf32, #tpu.memory_space<vmem>>, %arg4: memref<128x128xbf16, #tpu.memory_space<vmem>>, %arg5: memref<1x128xf32, #tpu.memory_space<vmem>>, %arg6: memref<8x128xf32, #tpu.memory_space<vmem>>) attributes {dimension_semantics = [#tpu.dimension_semantics<parallel>], iteration_bounds = array<i64: 1>, scalar_prefetch = 0 : i64, scratch_operands = 0 : i64, tpu.core_type = #tpu.core_type<tc>, window_params = [{transform_indices = @transform_0, window_bounds = array<i64: 8, 1>}, {pipeline_mode = #tpu.pipeline_mode<synchronous>, transform_indices = @transform_1, window_bounds = array<i64: 1, 128>}, {pipeline_mode = #tpu.pipeline_mode<synchronous>, transform_indices = @transform_2, window_bounds = array<i64: 1, 128>}, {pipeline_mode = #tpu.pipeline_mode<synchronous>, transform_indices = @transform_3, window_bounds = array<i64: 128, 128>}, {pipeline_mode = #tpu.pipeline_mode<synchronous>, transform_indices = @transform_4, window_bounds = array<i64: 1, 128>}, {transform_indices = @transform_5, window_bounds = array<i64: 8, 128>}]} {
    %c0 = arith.constant 0 : index
    %c0_0 = arith.constant 0 : index
    %0 = vector.load %arg1[%c0, %c0_0] : memref<8x1xf32, #tpu.memory_space<vmem>>, vector<8x1xf32>
    %c0_1 = arith.constant 0 : index
    %c0_2 = arith.constant 0 : index
    %1 = vector.load %arg2[%c0_1, %c0_2] : memref<1x128xf32, #tpu.memory_space<vmem>>, vector<1x128xf32>
    %2 = vector.broadcast %0 : vector<8x1xf32> to vector<8x128xf32>
    %3 = vector.broadcast %1 : vector<1x128xf32> to vector<8x128xf32>
    %4 = arith.mulf %2, %3 : vector<8x128xf32>
    %c0_3 = arith.constant 0 : index
    %c0_4 = arith.constant 0 : index
    %5 = vector.load %arg3[%c0_3, %c0_4] : memref<1x128xf32, #tpu.memory_space<vmem>>, vector<1x128xf32>
    %6 = vector.broadcast %5 : vector<1x128xf32> to vector<8x128xf32>
    %7 = arith.addf %4, %6 : vector<8x128xf32>
    %8 = math.sin %7 : vector<8x128xf32>
    %9 = arith.truncf %8 : vector<8x128xf32> to vector<8x128xbf16>
    %c0_5 = arith.constant 0 : index
    %c0_6 = arith.constant 0 : index
    %10 = vector.load %arg4[%c0_5, %c0_6] : memref<128x128xbf16, #tpu.memory_space<vmem>>, vector<128x128xbf16>
    %cst = arith.constant dense<0.000000e+00> : vector<8x128xf32>
    %11 = tpu.matmul %9, %10, %cst {dimension_numbers = #tpu.dot_dimension_numbers<[1], [0], [0], [1], [0, 0, 1, 1], [], []>} : vector<8x128xbf16>, vector<128x128xbf16>, vector<8x128xf32> -> vector<8x128xf32>
    %c0_7 = arith.constant 0 : index
    %c0_8 = arith.constant 0 : index
    %12 = vector.load %arg5[%c0_7, %c0_8] : memref<1x128xf32, #tpu.memory_space<vmem>>, vector<1x128xf32>
    %13 = vector.broadcast %12 : vector<1x128xf32> to vector<8x128xf32>
    %14 = arith.addf %11, %13 : vector<8x128xf32>
    %c0_9 = arith.constant 0 : index
    %c0_10 = arith.constant 0 : index
    %15 = vector.load %arg6[%c0_9, %c0_10] : memref<8x128xf32, #tpu.memory_space<vmem>>, vector<8x128xf32>
    tpu.vector_store %arg6[%c0_9, %c0_10], %14 {strides = array<i32>} : memref<8x128xf32, #tpu.memory_space<vmem>>, vector<8x128xf32>,
    return
  }
  func.func @transform_0(%arg0: i32) -> (i32, i32) {
    %c0_i32 = arith.constant 0 : i32
    %c0_i32_0 = arith.constant 0 : i32
    return %arg0, %c0_i32 : i32, i32
  }
  func.func @transform_1(%arg0: i32) -> (i32, i32) {
    %c0_i32 = arith.constant 0 : i32
    %c0_i32_0 = arith.constant 0 : i32
    %c0_i32_1 = arith.constant 0 : i32
    return %c0_i32, %c0_i32_0 : i32, i32
  }
  func.func @transform_2(%arg0: i32) -> (i32, i32) {
    %c0_i32 = arith.constant 0 : i32
    %c0_i32_0 = arith.constant 0 : i32
    %c0_i32_1 = arith.constant 0 : i32
    return %c0_i32, %c0_i32_0 : i32, i32
  }
  func.func @transform_3(%arg0: i32) -> (i32, i32) {
    %c0_i32 = arith.constant 0 : i32
    %c0_i32_0 = arith.constant 0 : i32
    %c0_i32_1 = arith.constant 0 : i32
    return %c0_i32, %c0_i32_0 : i32, i32
  }
  func.func @transform_4(%arg0: i32) -> (i32, i32) {
    %c0_i32 = arith.constant 0 : i32
    %c0_i32_0 = arith.constant 0 : i32
    %c0_i32_1 = arith.constant 0 : i32
    return %c0_i32, %c0_i32_0 : i32, i32
  }
  func.func @transform_5(%arg0: i32) -> (i32, i32) {
    %c0_i32 = arith.constant 0 : i32
    %c0_i32_0 = arith.constant 0 : i32
    return %arg0, %c0_i32 : i32, i32
  }
}

</mosaic_0001>

<llo_original>
// kernel: embedding_forward.1
$region0: #{embedding_forward.1}
  #allocation0 [shape = 'u32[]', space=smem, size = 0x4, offset = 0x4, fixed_abs, tag = 'smem constant byte address 0x4 - core index']
  #allocation1 [shape = 'u32[72,128]{1,0:T(1,128)}', space=vmem, size = 0x9000, scoped, tag = 'internal scratch']
  %s0 = inlined_call_operand.vmem [shape: f32[8,1], index: 0, kind: input, shape index: {}]
  %s1 = inlined_call_operand.vmem [shape: f32[1,128], index: 1, kind: input, shape index: {}]
  %s2 = inlined_call_operand.vmem [shape: f32[1,128], index: 2, kind: input, shape index: {}]
  %s3 = inlined_call_operand.vmem [shape: bf16[128,128], index: 3, kind: input, shape index: {}]
  %s4 = inlined_call_operand.vmem [shape: f32[1,128], index: 4, kind: input, shape index: {}]
  %s5 = inlined_call_operand.hbm [shape: f32[8,128], index: 5, kind: output, shape index: {}]
  %s6 = sld [smem:[#allocation0]]
  $region30: #{embedding_forward.1} parent=0
    _
  %s8 = ssub.s32 1, %s6
  %s9 = scalar_select 0, %s8, %s6
  $region1: #{embedding_forward.1} parent=0
    #allocation2 [shape = 'u8[4096]{0}', space=vmem, size = 0x1000, scoped, tag = 'output window, operand 0, single buffered']
    #allocation3 [shape = 's32[1]{0}', space=sflag, size = 0x4, scoped, tag = 'scoped memory for embedding_forward.1']
    %10 = vsyncpa [#allocation3], 0
    // Predicated region
    $region2: #{embedding_forward.1} parent=1 // pred_check
      _
    $region3: #{embedding_forward.1} parent=1 // pred_check_branch
      %12 = sbr.rel (0) target = $region5
    $region4: #{embedding_forward.1} parent=1 // pred_region
      _
    $region5: #{embedding_forward.1} parent=1 // pred_fallthru
      _
    // Predicated region
    $region6: #{embedding_forward.1} parent=1 // pred_check
      _
    $region7: #{embedding_forward.1} parent=1 // pred_check_branch
      %14 = sbr.rel (0) target = $region9
    $region8: #{embedding_forward.1} parent=1 // pred_region
      _
    $region9: #{embedding_forward.1} parent=1 // pred_fallthru
      _
    // Predicated region
    $region10: #{embedding_forward.1} parent=1 // pred_check
      _
    $region11: #{embedding_forward.1} parent=1 // pred_check_branch
      %16 = sbr.rel (0) target = $region13
    $region12: #{embedding_forward.1} parent=1 // pred_region
      _
    $region13: #{embedding_forward.1} parent=1 // pred_fallthru
      _
    // Predicated region
    $region14: #{embedding_forward.1} parent=1 // pred_check
      _
    $region15: #{embedding_forward.1} parent=1 // pred_check_branch
      %18 = sbr.rel (0) target = $region17
    $region16: #{embedding_forward.1} parent=1 // pred_region
      _
    $region17: #{embedding_forward.1} parent=1 // pred_fallthru
      _
    // Predicated region
    $region18: #{embedding_forward.1} parent=1 // pred_check
      _
    $region19: #{embedding_forward.1} parent=1 // pred_check_branch
      %20 = sbr.rel (0) target = $region21
    $region20: #{embedding_forward.1} parent=1 // pred_region
      _
    $region21: #{embedding_forward.1} parent=1 // pred_fallthru
      _
    %v21 = vld [vmem:[%s0] sm:$0xff]
    %v22 = vld [vmem:[%s1] sm:$0x1]
    %24 = vset.pattern.permute.xlu0 0
    %25 = vperm.xlu0 %24, %v21
    %v26 = vpop.permute.xlu0 %25
    %v29 = vperm.slane %v22, 0
    %v31 = vmul.f32 %v26, %v29
    %v32 = vld [vmem:[%s2] sm:$0x1]
    %v34 = vperm.slane %v32, 0
    %v36 = vadd.f32 %v31, %v34
    %v37 = vand.u32 2147483647, %v36
    %vm38 = vcmp.le.f32.partialorder %v37, 0.7853982
    %vm39 = vcmp.lt.s32.totalorder %v36, 0
    %v40 = vand.u32 %v36, 2139095040
    %v41 = vshrl.u32 %v40, 23
    %v42 = vsub.s32 %v41, 127
    %v43 = vand.u32 2147483647, %v36
    %v44 = vand.u32 %v43, 8388607
    %v45 = vor.u32 %v44, 8388608
    %v46 = vsub.s32 0, %v45
    %v47 = vadd.s32 %v42, 1
    %vm48 = vcmp.gt.s32.totalorder %v47, 0
    %v49 = vsel %vm48, %v47, 0
    %v50 = vshrl.u32 %v49, 5
    %v51 = vand.u32 %v49, 31
    %v52 = vsub.s32 32, %v51
    %v53 = vshrl.u32 683565275, %v52
    %v54 = vshll.u32 683565275, %v51
    %v55 = vshrl.u32 2475754826, %v52
    %v56 = vor.u32 %v54, %v55
    %v57 = vshll.u32 2475754826, %v51
    %v58 = vshrl.u32 2131351028, %v52
    %v59 = vor.u32 %v57, %v58
    %v60 = vshll.u32 2131351028, %v51
    %v61 = vshrl.u32 2102212464, %v52
    %v62 = vor.u32 %v60, %v61
    %v63 = vshll.u32 2102212464, %v51
    %v64 = vshrl.u32 920167782, %v52
    %v65 = vor.u32 %v63, %v64
    %v66 = vshll.u32 920167782, %v51
    %v67 = vshrl.u32 1326507024, %v52
    %v68 = vor.u32 %v66, %v67
    %vm69 = vcmp.lt.s32.totalorder %v50, 1
    %vm70 = vcmp.lt.s32.totalorder %v50, 2
    %vm71 = vcmp.lt.s32.totalorder %v50, 3
    %vm72 = vcmp.lt.s32.totalorder %v50, 4
    %v73 = vsel %vm69, %v53, %v56
    %v74 = vsel %vm72, %v62, 2102212464
    %v75 = vsel %vm71, %v59, %v74
    %v76 = vsel %vm70, %v73, %v75
    %v77 = vsel %vm69, %v56, %v59
    %v78 = vsel %vm72, %v65, 920167782
    %v79 = vsel %vm71, %v62, %v78
    %v80 = vsel %vm70, %v77, %v79
    %v81 = vsel %vm69, %v59, %v62
    %v82 = vsel %vm72, %v68, 1326507024
    %v83 = vsel %vm71, %v65, %v82
    %v84 = vsel %vm70, %v81, %v83
    %v85 = vshll.u32 %v45, 8
    %v86 = vand.u32 %v85, 65535
    %v87 = vshrl.u32 %v85, 16
    %v88 = vand.u32 %v84, 65535
    %v89 = vshrl.u32 %v84, 16
    %v90 = vmul.u32 %v86, %v88
    %v91 = vmul.u32 %v86, %v89
    %v92 = vmul.u32 %v87, %v88
    %v93 = vmul.u32 %v87, %v89
    %v94 = vshll.u32 %v91, 16
    %v95 = vshrl.u32 %v91, 16
    %v96 = vshll.u32 %v92, 16
    %v97 = vshrl.u32 %v92, 16
    %vm98 = vc.u32 %v90, %v94
    %v99 = vsel %vm98, 1, 0
    %v100 = vadd.s32 %v90, %v94
    %v101 = vadd.s32 %v93, %v99
    %vm102 = vc.u32 %v100, %v96
    %v103 = vsel %vm102, 1, 0
    %v104 = vadd.s32 %v100, %v96
    %v105 = vadd.s32 %v101, %v103
    %v106 = vadd.s32 %v105, %v95
    %v107 = vadd.s32 %v106, %v97
    %v108 = vand.u32 %v85, 65535
    %v109 = vshrl.u32 %v85, 16
    %v110 = vand.u32 %v80, 65535
    %v111 = vshrl.u32 %v80, 16
    %v112 = vmul.u32 %v108, %v110
    %v113 = vmul.u32 %v108, %v111
    %v114 = vmul.u32 %v109, %v110
    %v115 = vmul.u32 %v109, %v111
    %v116 = vshll.u32 %v113, 16
    %v117 = vshrl.u32 %v113, 16
    %v118 = vshll.u32 %v114, 16
    %v119 = vshrl.u32 %v114, 16
    %vm120 = vc.u32 %v112, %v116
    %v121 = vsel %vm120, 1, 0
    %v122 = vadd.s32 %v112, %v116
    %v123 = vadd.s32 %v115, %v121
    %vm124 = vc.u32 %v122, %v118
    %v125 = vsel %vm124, 1, 0
    %v126 = vadd.s32 %v122, %v118
    %v127 = vadd.s32 %v123, %v125
    %v128 = vadd.s32 %v127, %v117
    %v129 = vadd.s32 %v128, %v119
    %v130 = vmul.u32 %v85, %v76
    %v131 = vadd.s32 %v107, %v126
    %vm132 = vc.u32 %v107, %v126
    %v133 = vadd.s32 %v129, 1
    %v134 = vsel %vm132, %v133, %v129
    %v135 = vadd.s32 %v130, %v134
    %v136 = vadd.s32 %v135, 536870912
    %v137 = vshrl.u32 %v136, 30
    %v138 = vshll.u32 %v137, 30
    %v139 = vsub.s32 %v135, %v138
    %vm140 = vcmp.lt.s32.totalorder %v139, 0
    %v141 = vsub.s32 0, %v139
    %v142 = vsel %vm140, %v141, %v139
    %v143 = vclz %v142
    %v144 = vsub.s32 %v143, 2
    %vm145 = vcmp.gt.s32.totalorder 0, %v144
    %v146 = vsel %vm145, 0, %v144
    %v147 = vsub.s32 32, %v146
    %v148 = vshll.u32 %v139, %v146
    %v149 = vshrl.u32 %v131, %v147
    %v150 = vor.u32 %v148, %v149
    %v151 = vsub.s32 4294967266, %v146
    %v152 = vadd.s32 %v151, 127
    %v153 = vshll.u32 %v152, 23
    %v154 = vor.u32 4788187, %v153
    %v155 = vand.u32 2147483647, %v154
    %v157 = vcvt.s32.f32 %v150
    %v158 = vmul.f32 %v157, %v155
    %v159 = vxor.u32 %v158, 2147483648
    %v160 = vsel %vm39, %v159, %v158
    %v161 = vsub.s32 4, %v137
    %v162 = vsel %vm39, %v161, %v137
    %v163 = vsel %vm38, %v36, %v160
    %v164 = vsel %vm38, 0, %v162
    %v165 = vmul.f32 %v163, %v163
    %v166 = vmul.f32 %v165, -0.001358992
    %v167 = vadd.f32 %v166, 0.041655596
    %v168 = vmul.f32 %v165, %v167
    %v169 = vadd.f32 %v168, -0.4999988
    %v170 = vmul.f32 %v165, %v169
    %v171 = vadd.f32 1.0, %v170
    %v172 = vmul.f32 %v163, %v163
    %v173 = vmul.f32 %v172, -0.00019511016
    %v174 = vadd.f32 %v173, 0.008332121
    %v175 = vmul.f32 %v172, %v174
    %v176 = vadd.f32 %v175, -0.16666654
    %v177 = vmul.f32 %v172, %v176
    %v178 = vadd.f32 %v177, 1.0
    %v179 = vmul.f32 %v178, %v163
    %vm180 = vweird.f32 %v36
    %v181 = vadd.s32 %v164, 3
    %v182 = vand.u32 %v181, 3
    %vm183 = vcmp.lt.s32.totalorder %v182, 2
    %vm184 = vcmp.eq.s32.totalorder %v182, 0
    %v185 = vxor.u32 %v179, 2147483648
    %v186 = vsel %vm184, %v171, %v185
    %vm187 = vcmp.eq.s32.totalorder %v182, 2
    %v188 = vxor.u32 %v171, 2147483648
    %v189 = vsel %vm187, %v188, %v179
    %v190 = vsel %vm183, %v186, %v189
    %v191 = vsel %vm180, nan, %v190
    %v192 = vpack.c.bf16 %v191, %v191
    %v193 = vld [vmem:[%s3] sm:$0xf]
    %v194 = vld [vmem:[%s3 + $0x4] sm:$0xf]
    %v195 = vld [vmem:[%s3 + $0x8] sm:$0xf]
    %v196 = vld [vmem:[%s3 + $0xc] sm:$0xf]
    %v197 = vld [vmem:[%s3 + $0x10] sm:$0xf]
    %v198 = vld [vmem:[%s3 + $0x14] sm:$0xf]
    %v199 = vld [vmem:[%s3 + $0x18] sm:$0xf]
    %v200 = vld [vmem:[%s3 + $0x1c] sm:$0xf]
    %v201 = vld [vmem:[%s3 + $0x20] sm:$0xf]
    %v202 = vld [vmem:[%s3 + $0x24] sm:$0xf]
    %v203 = vld [vmem:[%s3 + $0x28] sm:$0xf]
    %v204 = vld [vmem:[%s3 + $0x2c] sm:$0xf]
    %v205 = vld [vmem:[%s3 + $0x30] sm:$0xf]
    %v206 = vld [vmem:[%s3 + $0x34] sm:$0xf]
    %v207 = vld [vmem:[%s3 + $0x38] sm:$0xf]
    %v208 = vld [vmem:[%s3 + $0x3c] sm:$0xf]
    %v209 = vld [vmem:[%s4] sm:$0x1]
    %v211 = vperm.slane %v209, 0
    %v229 = vunpack.c.l.b16 %v193
    %v230 = vunpack.c.l.b16 %v194
    %v231 = vunpack.c.l.b16 %v195
    %v232 = vunpack.c.l.b16 %v196
    %v233 = vunpack.c.l.b16 %v197
    %v234 = vunpack.c.l.b16 %v198
    %v235 = vunpack.c.l.b16 %v199
    %v236 = vunpack.c.l.b16 %v200
    %v237 = vunpack.c.l.b16 %v201
    %v238 = vunpack.c.l.b16 %v202
    %v239 = vunpack.c.l.b16 %v203
    %v240 = vunpack.c.l.b16 %v204
    %v241 = vunpack.c.l.b16 %v205
    %v242 = vunpack.c.l.b16 %v206
    %v243 = vunpack.c.l.b16 %v207
    %v244 = vunpack.c.l.b16 %v208
    %v245 = vpack.c.b16 %v230, %v229
    %v246 = vpack.c.b16 %v232, %v231
    %v247 = vpack.c.b16 %v234, %v233
    %v248 = vpack.c.b16 %v236, %v235
    %v249 = vpack.c.b16 %v238, %v237
    %v250 = vpack.c.b16 %v240, %v239
    %v251 = vpack.c.b16 %v242, %v241
    %v252 = vpack.c.b16 %v244, %v243
    %261 = vmatpush.bf16.msra.mxu0 %v252
    %262 = vmatpush.bf16.msra.mxu0 %v251
    %263 = vmatpush.bf16.msra.mxu0 %v250
    %264 = vmatpush.bf16.msra.mxu0 %v249
    %265 = vmatpush.bf16.msra.mxu0 %v248
    %266 = vmatpush.bf16.msra.mxu0 %v247
    %267 = vmatpush.bf16.msra.mxu0 %v246
    %268 = vmatpush.bf16.msra.mxu0 %v245
    %269 = vmatmul.bf16.gmra.mxu0 %v192
    %v270 = vpop.f32.mrf.mxu0
    %v271 = vadd.f32 %v211, %v270
    %v272 = vpop.f32.mrf.mxu0
    %273 = vdwg.mxu0
    %274 = vst [vmem:[#allocation2] sm:$0xff] %v271
    // Predicated region
    $region22: #{embedding_forward.1} parent=1 // pred_check
      _
    $region23: #{embedding_forward.1} parent=1 // pred_check_branch
      %276 = sbr.rel (0) target = $region25
    $region24: #{embedding_forward.1} parent=1 // pred_region
      %278 = vsyncadd [#allocation3], 0
      %s280 = sshll.u32 [#allocation2], 4
      %s281 = int_to_ptr.vmem [resolvable:$true] %s280
      %s282 = sshll.u32 %s5, 4
      %s283 = int_to_ptr.hbm [resolvable:$true] %s282
      %285 = dma.vmem_to_hbm [thread:$0]  %s281, 128, %s283, [#allocation3]
    $region25: #{embedding_forward.1} parent=1 // pred_fallthru
      _
    // Predicated region
    $region26: #{embedding_forward.1} parent=1 // pred_check
      _
    $region27: #{embedding_forward.1} parent=1 // pred_check_branch
      %287 = sbr.rel (0) target = $region29
    $region28: #{embedding_forward.1} parent=1 // pred_region
      %289 = dma.done [#allocation3], 128
    $region29: #{embedding_forward.1} parent=1 // pred_fallthru
      _
    %290 = vsyncpa [#allocation3], 1

</llo_original>
